<compile_context>
chip_gen: v7x
topology: tpu7x:2x2x1
jax: 0.10.0
libtpu: 0.0.40
codegen_flags: <defaults>
</compile_context>

<pallas_src>
import functools

import jax
import jax.numpy as jnp
from jax import lax
from jax.experimental import pallas as pl
from jax.experimental.pallas import tpu as pltpu


def _conv3x3_relu_kernel(x_ref, w_ref, b_ref, o_ref, *, tile_h, width, cin):
    # x_ref : (1, H+2, W+2, Cin)   spatially pre-padded NHWC image (resident)
    # w_ref : (9*Cin, Cout)        im2col weights, row order = (kh, kw, ci)
    # b_ref : (1, Cout)            f32 bias
    # o_ref : (1, Cout, tile_h*W)  channel-major, lane-dense output tile
    r = pl.program_id(1)
    row0 = pl.multiple_of(r * tile_h, tile_h)

    # One load of the (tile_h+2)-row halo window for this row tile.
    x = x_ref[0, pl.ds(row0, tile_h + 2), :, :]           # (tile_h+2, W+2, Cin)

    # Build the (tile_h*W, 9*Cin) im2col patch matrix: 9 shifted views,
    # flattened to 2-D and concatenated along the contraction (lane) axis.
    taps = []
    for kh in range(3):
        x_kh = x[kh:kh + tile_h]                          # (tile_h, W+2, Cin)
        for kw in range(3):
            taps.append(
                x_kh[:, kw:kw + width, :].reshape(tile_h * width, cin))
    patches = jnp.concatenate(taps, axis=1)               # (tile_h*W, 9*Cin)

    # Single 2-D MXU contraction, f32 accumulate; fused bias + ReLU epilogue.
    acc = jnp.dot(patches, w_ref[...], preferred_element_type=jnp.float32)
    acc = jnp.maximum(acc + b_ref[...], 0.0)              # (tile_h*W, Cout)

    # Small (tile_h*W, Cout) -> (Cout, tile_h*W) transpose so the HBM store is
    # lane-dense (last dim a multiple of 128) and already NCHW(-flattened).
    o_ref[0] = jnp.transpose(acc).astype(o_ref.dtype)


def _estimate_vmem_bytes(tile_h, H, W, cin, cout, cs, osz):
    """Rough per-step VMEM footprint (resident blocks + in-kernel temporaries)."""
    patches = tile_h * W * 9 * cin * cs
    acc = tile_h * W * cout * 4
    out_blk = cout * tile_h * W * osz
    halo = (tile_h + 2) * (W + 2) * cin * cs
    # Input image double-buffered across the batch axis; weights/bias resident.
    resident = 2 * (H + 2) * (W + 2) * cin * cs + 2 * (9 * cin * cout + cout) * cs
    return resident + 3 * patches + 2 * acc + 2 * out_blk + halo


def _pick_tile_h(H, W, cin, cout, cs, osz, budget=36 * 1024 * 1024):
    cands = [th for th in (128, 64, 32, 16, 8, 4, 2, 1) if th <= H and H % th == 0]
    # 1st choice: lane-aligned flattened store width, >1 row tile per image,
    # and within the VMEM budget.
    for th in cands:
        if (th < H and (th * W) % 128 == 0
                and _estimate_vmem_bytes(th, H, W, cin, cout, cs, osz) <= budget):
            return th
    # 2nd choice: anything that fits the budget.
    for th in cands:
        if _estimate_vmem_bytes(th, H, W, cin, cout, cs, osz) <= budget:
            return th
    return cands[-1] if cands else H


def single_conv_3_pallas(x_nchw, w_oihw, bias, *, compute_dtype=jnp.float32,
                         tile_h=None):
    """Conv2d(3x3, stride 1, padding=1) + ReLU.  x_nchw: (N, Cin, H, W)."""
    N, Cin, H, W = x_nchw.shape
    Cout = w_oihw.shape[0]
    out_dtype = x_nchw.dtype
    cs = jnp.dtype(compute_dtype).itemsize
    osz = jnp.dtype(out_dtype).itemsize

    if tile_h is None:
        tile_h = _pick_tile_h(H, W, Cin, Cout, cs, osz)
    n_row_tiles = H // tile_h

    # Input-side layout glue (fuses to one XLA copy pass): NCHW -> padded NHWC.
    x_nhwc = jnp.transpose(x_nchw, (0, 2, 3, 1))
    x_pad = jnp.pad(x_nhwc, ((0, 0), (1, 1), (1, 1), (0, 0))).astype(compute_dtype)

    # OIHW -> (kh, kw, ci) x co, matching the in-kernel tap concat order.
    w2 = jnp.transpose(w_oihw, (2, 3, 1, 0)).reshape(9 * Cin, Cout)
    w2 = w2.astype(compute_dtype)
    b2 = bias.reshape(1, Cout).astype(jnp.float32)

    flops = 2 * N * H * W * 9 * Cin * Cout
    bytes_accessed = (x_pad.size * x_pad.dtype.itemsize
                      + w2.size * w2.dtype.itemsize
                      + b2.size * b2.dtype.itemsize
                      + N * Cout * H * W * osz)

    vmem_limit = int(min(64 * 1024 * 1024,
                         max(32 * 1024 * 1024,
                             1.5 * _estimate_vmem_bytes(tile_h, H, W, Cin, Cout,
                                                        cs, osz))))

    kernel = functools.partial(_conv3x3_relu_kernel,
                               tile_h=tile_h, width=W, cin=Cin)

    out_flat = pl.pallas_call(
        kernel,
        out_shape=jax.ShapeDtypeStruct((N, Cout, H * W), out_dtype),
        grid_spec=pltpu.PrefetchScalarGridSpec(
            num_scalar_prefetch=0,
            grid=(N, n_row_tiles),
            in_specs=[
                # Full padded image per batch; resident across the row axis.
                pl.BlockSpec((1, H + 2, W + 2, Cin), lambda n, r: (n, 0, 0, 0)),
                pl.BlockSpec((9 * Cin, Cout), lambda n, r: (0, 0)),
                pl.BlockSpec((1, Cout), lambda n, r: (0, 0)),
            ],
            out_specs=pl.BlockSpec((1, Cout, tile_h * W),
                                   lambda n, r: (n, 0, r)),
        ),
        compiler_params=pltpu.CompilerParams(
            dimension_semantics=("parallel", "parallel"),
            vmem_limit_bytes=vmem_limit),
        cost_estimate=pl.CostEstimate(flops=flops, transcendentals=0,
                                      bytes_accessed=bytes_accessed),
    )(x_pad, w2, b2)

    # Free (metadata-only) reshape back to NCHW.
    return out_flat.reshape(N, Cout, H, W)


def _reference(x_nchw, w_oihw, bias):
    y = lax.conv_general_dilated(
        x_nchw, w_oihw, window_strides=(1, 1), padding=((1, 1), (1, 1)),
        dimension_numbers=("NCHW", "OIHW", "NCHW"))
    return jnp.maximum(y + bias[None, :, None, None], 0.0)


if __name__ == "__main__":
    key = jax.random.PRNGKey(0)
    N, Cin, Cout, H, W = 2, 4, 8, 16, 16

    kx, kw_key, kb = jax.random.split(key, 3)
    x = jax.random.normal(kx, (N, Cin, H, W), dtype=jnp.float32)
    w = jax.random.normal(kw_key, (Cout, Cin, 3, 3), dtype=jnp.float32) * 0.1
    b = jax.random.normal(kb, (Cout,), dtype=jnp.float32) * 0.1

    ref = _reference(x, w, b)

    # f32 path (matches PyTorch module numerics).
    out = single_conv_3_pallas(x, w, b)
    jax.block_until_ready(out)
    assert out.shape == (N, Cout, H, W)
    assert jnp.allclose(out, ref, atol=1e-4, rtol=1e-4)

    # bf16 MXU path (2x MXU throughput / half the DMA bytes), f32 epilogue.
    out_bf16 = single_conv_3_pallas(x, w, b, compute_dtype=jnp.bfloat16)
    jax.block_until_ready(out_bf16)
    assert jnp.allclose(out_bf16, ref, atol=5e-2, rtol=5e-2)

    print("KERNEL_OK")
</pallas_src>

<mosaic_0001>
module attributes {stable_mosaic.version = 11 : i64} {
  func.func @_conv3x3_relu_kernel(%arg0: i32, %arg1: i32, %arg2: memref<1x18x18x4xf32, #tpu.memory_space<vmem>>, %arg3: memref<36x8xf32, #tpu.memory_space<vmem>>, %arg4: memref<1x8xf32, #tpu.memory_space<vmem>>, %arg5: memref<1x8x128xf32, #tpu.memory_space<vmem>>) attributes {dimension_semantics = [#tpu.dimension_semantics<parallel>, #tpu.dimension_semantics<parallel>], iteration_bounds = array<i64: 2, 2>, scalar_prefetch = 0 : i64, scratch_operands = 0 : i64, tpu.core_type = #tpu.core_type<tc>, window_params = [{transform_indices = @transform_0, window_bounds = array<i64: 1, 18, 18, 4>}, {pipeline_mode = #tpu.pipeline_mode<synchronous>, transform_indices = @transform_1, window_bounds = array<i64: 36, 8>}, {pipeline_mode = #tpu.pipeline_mode<synchronous>, transform_indices = @transform_2, window_bounds = array<i64: 1, 8>}, {transform_indices = @transform_3, window_bounds = array<i64: 1, 8, 128>}]} {
    %c8_i32 = arith.constant 8 : i32
    %0 = arith.muli %arg1, %c8_i32 : i32
    %1 = tpu.assume_multiple %0, 8 : i32
    %c0 = arith.constant 0 : index
    %2 = arith.index_cast %1 : i32 to index
    %c0_0 = arith.constant 0 : index
    %c0_1 = arith.constant 0 : index
    %3 = vector.load %arg2[%c0, %2, %c0_0, %c0_1] : memref<1x18x18x4xf32, #tpu.memory_space<vmem>>, vector<1x10x18x4xf32>
    %4 = vector.shape_cast %3 : vector<1x10x18x4xf32> to vector<10x18x4xf32>
    %5 = vector.extract_strided_slice %4 {offsets = [0, 0, 0], sizes = [8, 18, 4], strides = [1, 1, 1]} : vector<10x18x4xf32> to vector<8x18x4xf32>
    %6 = vector.extract_strided_slice %5 {offsets = [0, 0, 0], sizes = [8, 16, 4], strides = [1, 1, 1]} : vector<8x18x4xf32> to vector<8x16x4xf32>
    %7 = vector.shape_cast %6 : vector<8x16x4xf32> to vector<128x4xf32>
    %8 = vector.extract_strided_slice %5 {offsets = [0, 1, 0], sizes = [8, 16, 4], strides = [1, 1, 1]} : vector<8x18x4xf32> to vector<8x16x4xf32>
    %9 = vector.shape_cast %8 : vector<8x16x4xf32> to vector<128x4xf32>
    %10 = vector.extract_strided_slice %5 {offsets = [0, 2, 0], sizes = [8, 16, 4], strides = [1, 1, 1]} : vector<8x18x4xf32> to vector<8x16x4xf32>
    %11 = vector.shape_cast %10 : vector<8x16x4xf32> to vector<128x4xf32>
    %12 = vector.extract_strided_slice %4 {offsets = [1, 0, 0], sizes = [8, 18, 4], strides = [1, 1, 1]} : vector<10x18x4xf32> to vector<8x18x4xf32>
    %13 = vector.extract_strided_slice %12 {offsets = [0, 0, 0], sizes = [8, 16, 4], strides = [1, 1, 1]} : vector<8x18x4xf32> to vector<8x16x4xf32>
    %14 = vector.shape_cast %13 : vector<8x16x4xf32> to vector<128x4xf32>
    %15 = vector.extract_strided_slice %12 {offsets = [0, 1, 0], sizes = [8, 16, 4], strides = [1, 1, 1]} : vector<8x18x4xf32> to vector<8x16x4xf32>
    %16 = vector.shape_cast %15 : vector<8x16x4xf32> to vector<128x4xf32>
    %17 = vector.extract_strided_slice %12 {offsets = [0, 2, 0], sizes = [8, 16, 4], strides = [1, 1, 1]} : vector<8x18x4xf32> to vector<8x16x4xf32>
    %18 = vector.shape_cast %17 : vector<8x16x4xf32> to vector<128x4xf32>
    %19 = vector.extract_strided_slice %4 {offsets = [2, 0, 0], sizes = [8, 18, 4], strides = [1, 1, 1]} : vector<10x18x4xf32> to vector<8x18x4xf32>
    %20 = vector.extract_strided_slice %19 {offsets = [0, 0, 0], sizes = [8, 16, 4], strides = [1, 1, 1]} : vector<8x18x4xf32> to vector<8x16x4xf32>
    %21 = vector.shape_cast %20 : vector<8x16x4xf32> to vector<128x4xf32>
    %22 = vector.extract_strided_slice %19 {offsets = [0, 1, 0], sizes = [8, 16, 4], strides = [1, 1, 1]} : vector<8x18x4xf32> to vector<8x16x4xf32>
    %23 = vector.shape_cast %22 : vector<8x16x4xf32> to vector<128x4xf32>
    %24 = vector.extract_strided_slice %19 {offsets = [0, 2, 0], sizes = [8, 16, 4], strides = [1, 1, 1]} : vector<8x18x4xf32> to vector<8x16x4xf32>
    %25 = vector.shape_cast %24 : vector<8x16x4xf32> to vector<128x4xf32>
    %26 = tpu.concatenate %7, %9, %11, %14, %16, %18, %21, %23, %25 in 1 : vector<128x4xf32>, vector<128x4xf32>, vector<128x4xf32>, vector<128x4xf32>, vector<128x4xf32>, vector<128x4xf32>, vector<128x4xf32>, vector<128x4xf32>, vector<128x4xf32> -> vector<128x36xf32>
    %c0_2 = arith.constant 0 : index
    %c0_3 = arith.constant 0 : index
    %27 = vector.load %arg3[%c0_2, %c0_3] : memref<36x8xf32, #tpu.memory_space<vmem>>, vector<36x8xf32>
    %cst = arith.constant dense<0.000000e+00> : vector<128x8xf32>
    %28 = tpu.matmul %26, %27, %cst {dimension_numbers = #tpu.dot_dimension_numbers<[1], [0], [0], [1], [0, 0, 1, 1], [], []>} : vector<128x36xf32>, vector<36x8xf32>, vector<128x8xf32> -> vector<128x8xf32>
    %c0_4 = arith.constant 0 : index
    %c0_5 = arith.constant 0 : index
    %29 = vector.load %arg4[%c0_4, %c0_5] : memref<1x8xf32, #tpu.memory_space<vmem>>, vector<1x8xf32>
    %30 = vector.broadcast %29 : vector<1x8xf32> to vector<128x8xf32>
    %31 = arith.addf %28, %30 : vector<128x8xf32>
    %cst_6 = arith.constant 0.000000e+00 : f32
    %32 = vector.broadcast %cst_6 : f32 to vector<128x8xf32>
    %33 = arith.maximumf %31, %32 : vector<128x8xf32>
    %34 = tpu.transpose %33, [1, 0] : vector<128x8xf32> -> vector<8x128xf32>
    %c0_7 = arith.constant 0 : index
    %c0_8 = arith.constant 0 : index
    %c0_9 = arith.constant 0 : index
    %35 = vector.load %arg5[%c0_7, %c0_8, %c0_9] : memref<1x8x128xf32, #tpu.memory_space<vmem>>, vector<1x8x128xf32>
    %36 = vector.shape_cast %35 : vector<1x8x128xf32> to vector<8x128xf32>
    %37 = vector.shape_cast %34 : vector<8x128xf32> to vector<1x8x128xf32>
    tpu.vector_store %arg5[%c0_7, %c0_8, %c0_9], %37 {strides = array<i32>} : memref<1x8x128xf32, #tpu.memory_space<vmem>>, vector<1x8x128xf32>,
    return
  }
  func.func @transform_0(%arg0: i32, %arg1: i32) -> (i32, i32, i32, i32) {
    %c0_i32 = arith.constant 0 : i32
    %c0_i32_0 = arith.constant 0 : i32
    %c0_i32_1 = arith.constant 0 : i32
    %c0_i32_2 = arith.constant 0 : i32
    return %arg0, %c0_i32, %c0_i32_0, %c0_i32_1 : i32, i32, i32, i32
  }
  func.func @transform_1(%arg0: i32, %arg1: i32) -> (i32, i32) {
    %c0_i32 = arith.constant 0 : i32
    %c0_i32_0 = arith.constant 0 : i32
    %c0_i32_1 = arith.constant 0 : i32
    return %c0_i32, %c0_i32_0 : i32, i32
  }
  func.func @transform_2(%arg0: i32, %arg1: i32) -> (i32, i32) {
    %c0_i32 = arith.constant 0 : i32
    %c0_i32_0 = arith.constant 0 : i32
    %c0_i32_1 = arith.constant 0 : i32
    return %c0_i32, %c0_i32_0 : i32, i32
  }
  func.func @transform_3(%arg0: i32, %arg1: i32) -> (i32, i32, i32) {
    %c0_i32 = arith.constant 0 : i32
    %c0_i32_0 = arith.constant 0 : i32
    return %arg0, %c0_i32, %arg1 : i32, i32, i32
  }
}

</mosaic_0001>

<llo_original>
// kernel: tpu_custom_call.1
$region0: #{tpu_custom_call.1}
  #allocation0 [shape = 'u32[]', space=smem, size = 0x4, offset = 0x4, fixed_abs, tag = 'smem constant byte address 0x4 - core index']
  #allocation1 [shape = 'u32[144,128]{1,0:T(1,128)}', space=vmem, size = 0x12000, scoped, tag = 'internal scratch']
  %s0 = inlined_call_operand.vmem [shape: f32[2,18,18,4], index: 0, kind: input, shape index: {}]
  %s1 = inlined_call_operand.vmem [shape: f32[36,8], index: 1, kind: input, shape index: {}]
  %s2 = inlined_call_operand.vmem [shape: f32[1,8], index: 2, kind: input, shape index: {}]
  %s3 = inlined_call_operand.hbm [shape: f32[2,8,256], index: 3, kind: output, shape index: {}]
  %s4 = sld [smem:[#allocation0]]
  $region45: #{tpu_custom_call.1} parent=0
    _
  %s6 = ssub.s32 1, %s4
  %s7 = scalar_select 0, %s6, %s4
  $region1: #{tpu_custom_call.1} parent=0
    #allocation2 [shape = 'u8[8192]{0}', space=vmem, size = 0x2000, scoped, tag = 'output window, operand 0']
    #allocation3 [shape = 's32[2]{0}', space=sflag, size = 0x8, scoped, tag = 'scoped memory for tpu_custom_call.1']
    %8 = vsyncpa [#allocation3], 0
    %s9 = scalar_lea.sflag [#allocation3], 1
    %10 = vsyncpa %s9, 0
    loop: start=0, step=1, limit=6
    $region2: #{tpu_custom_call.1} parent=1 // loop_pre_header
      _
    $region3: #{tpu_custom_call.1} parent=1 // loop_header
      %s12 = sphi 0, %s16
      %p13 = scmp.ge.s32.totalorder %s12, 6
      %s19 = sphi 0, %s31
      %s20 = sphi 0, %s27
      %s21 = sphi 0, %s19
      %s22 = sphi 0, %s20
      %s23 = sphi 0, %s21
      %s24 = sphi 0, %s22
      %s34 = sphi 0, %s36
      %s37 = sphi 0, %s34
      %s38 = sphi 0, %s37
      %s54 = sphi 0, %s38
      %s58 = sphi 0, %s58
      %s60 = sphi 0, %s58
      %s61 = sphi 0, %s60
      %s75 = sphi 0, %s61
      %s79 = sphi 0, %s79
      %s81 = sphi 0, %s79
      %s82 = sphi 0, %s81
      %s96 = sphi 0, %s82
      %s104 = sphi 0, %s106
      %s107 = sphi 0, %s104
      %s108 = sphi 0, %s107
      %s124 = sphi 0, %s108
    $region4: #{tpu_custom_call.1} parent=1 // loop_header_branch
      %15 = sbr.rel (%p13) target = $region8
    $region5: #{tpu_custom_call.1} parent=1 // loop_body
      %s17 = ssub.s32 %s12, 1
      %s18 = ssub.s32 %s12, 2
      %s25 = sadd.s32 1, %s20
      %p26 = scmp.ge.s32.totalorder %s25, 2
      %s27 = scalar_select %p26, 0, %s25
      %s28 = sadd.s32 1, %s19
      %s29 = scalar_select %p26, %s28, %s19
      %p30 = scmp.ge.s32.totalorder %s29, 2
      %s31 = scalar_select %p30, 0, %s29
      %s32 = ssub.s32 %s19, %s31
      %p33 = scmp.eq.s32.totalorder %s32, 0
      %s35 = sadd.s32 %s34, 1
      %s36 = scalar_select %p33, %s34, %s35
      %p39 = pneg %p33
      %p40 = scmp.eq.s32.totalorder %s12, 3
      %p41 = por %p39, %p40
      %p42 = scmp.ne.s32.totalorder %s34, %s37
      %p43 = scmp.eq.s32.totalorder %s12, 0
      %p44 = por %p42, %p43
      %p45 = scmp.ne.s32.totalorder %s34, %s37
      %p46 = scmp.eq.s32.totalorder %s17, 3
      %p47 = por %p45, %p46
      %p48 = scmp.ne.s32.totalorder %s37, %s38
      %p49 = scmp.eq.s32.totalorder %s17, 0
      %p50 = por %p48, %p49
      %p51 = scmp.ne.s32.totalorder %s37, %s38
      %p52 = scmp.eq.s32.totalorder %s18, 3
      %p53 = por %p51, %p52
      %p55 = scmp.ne.s32.totalorder %s38, %s54
      %p56 = scmp.eq.s32.totalorder %s18, 0
      %p57 = por %p55, %p56
      %s59 = sadd.s32 %s58, 1
      %p62 = scmp.eq.s32.totalorder %s12, 3
      %p63 = scmp.ne.s32.totalorder %s58, %s60
      %p64 = scmp.eq.s32.totalorder %s12, 0
      %p65 = por %p63, %p64
      %p66 = scmp.ne.s32.totalorder %s58, %s60
      %p67 = scmp.eq.s32.totalorder %s17, 3
      %p68 = por %p66, %p67
      %p69 = scmp.ne.s32.totalorder %s60, %s61
      %p70 = scmp.eq.s32.totalorder %s17, 0
      %p71 = por %p69, %p70
      %p72 = scmp.ne.s32.totalorder %s60, %s61
      %p73 = scmp.eq.s32.totalorder %s18, 3
      %p74 = por %p72, %p73
      %p76 = scmp.ne.s32.totalorder %s61, %s75
      %p77 = scmp.eq.s32.totalorder %s18, 0
      %p78 = por %p76, %p77
      %s80 = sadd.s32 %s79, 1
      %p83 = scmp.eq.s32.totalorder %s12, 3
      %p84 = scmp.ne.s32.totalorder %s79, %s81
      %p85 = scmp.eq.s32.totalorder %s12, 0
      %p86 = por %p84, %p85
      %p87 = scmp.ne.s32.totalorder %s79, %s81
      %p88 = scmp.eq.s32.totalorder %s17, 3
      %p89 = por %p87, %p88
      %p90 = scmp.ne.s32.totalorder %s81, %s82
      %p91 = scmp.eq.s32.totalorder %s17, 0
      %p92 = por %p90, %p91
      %p93 = scmp.ne.s32.totalorder %s81, %s82
      %p94 = scmp.eq.s32.totalorder %s18, 3
      %p95 = por %p93, %p94
      %p97 = scmp.ne.s32.totalorder %s82, %s96
      %p98 = scmp.eq.s32.totalorder %s18, 0
      %p99 = por %p97, %p98
      %s100 = ssub.s32 %s19, %s31
      %s101 = ssub.s32 %s20, %s27
      %s102 = sor.u32 %s100, %s101
      %p103 = scmp.eq.s32.totalorder %s102, 0
      %s105 = sadd.s32 %s104, 1
      %s106 = scalar_select %p103, %s104, %s105
      %p109 = pneg %p103
      %p110 = scmp.eq.s32.totalorder %s12, 3
      %p111 = por %p109, %p110
      %p112 = scmp.ne.s32.totalorder %s104, %s107
      %p113 = scmp.eq.s32.totalorder %s12, 0
      %p114 = por %p112, %p113
      %p115 = scmp.ne.s32.totalorder %s104, %s107
      %p116 = scmp.eq.s32.totalorder %s17, 3
      %p117 = por %p115, %p116
      %p118 = scmp.ne.s32.totalorder %s107, %s108
      %p119 = scmp.eq.s32.totalorder %s17, 0
      %p120 = por %p118, %p119
      %p121 = scmp.ne.s32.totalorder %s107, %s108
      %p122 = scmp.eq.s32.totalorder %s18, 3
      %p123 = por %p121, %p122
      %p125 = scmp.ne.s32.totalorder %s108, %s124
      %p126 = scmp.eq.s32.totalorder %s18, 0
      %p127 = por %p125, %p126
      %p128 = scmp.le.s32.totalorder 1, %s12
      %p129 = scmp.lt.s32.totalorder %s12, 5
      %p130 = pnand %p128, %p129
      %p131 = pneg %p130
      // Predicated region
      $region9: #{tpu_custom_call.1} parent=5 // pred_check
        _
      $region10: #{tpu_custom_call.1} parent=5 // pred_check_branch
        %133 = sbr.rel (%p130) target = $region12
      $region11: #{tpu_custom_call.1} parent=5 // pred_region
        %s134 = ssub.s32 %s12, 1
        // Predicated region
        $region13: #{tpu_custom_call.1} parent=11 // pred_check
          %p135 = pneg %p71
        $region14: #{tpu_custom_call.1} parent=11 // pred_check_branch
          %137 = sbr.rel (%p135) target = $region16
        $region15: #{tpu_custom_call.1} parent=11 // pred_region
          _
        $region16: #{tpu_custom_call.1} parent=11 // pred_fallthru
          _
        // Predicated region
        $region17: #{tpu_custom_call.1} parent=11 // pred_check
          %p138 = pneg %p92
        $region18: #{tpu_custom_call.1} parent=11 // pred_check_branch
          %140 = sbr.rel (%p138) target = $region20
        $region19: #{tpu_custom_call.1} parent=11 // pred_region
          _
        $region20: #{tpu_custom_call.1} parent=11 // pred_fallthru
          _
      $region12: #{tpu_custom_call.1} parent=5 // pred_fallthru
        _
      %p141 = scmp.lt.s32.totalorder %s12, 4
      // Predicated region
      $region21: #{tpu_custom_call.1} parent=5 // pred_check
        %p142 = pneg %p141
      $region22: #{tpu_custom_call.1} parent=5 // pred_check_branch
        %144 = sbr.rel (%p142) target = $region24
      $region23: #{tpu_custom_call.1} parent=5 // pred_region
        // Predicated region
        $region25: #{tpu_custom_call.1} parent=23 // pred_check
          %p145 = pneg %p44
        $region26: #{tpu_custom_call.1} parent=23 // pred_check_branch
          %147 = sbr.rel (%p145) target = $region28
        $region27: #{tpu_custom_call.1} parent=23 // pred_region
          %p148 = scmp.lt.s32.totalorder %s19, 1
          %s149 = scalar_select %p148, %s19, 1
          %s150 = smul.addr %s149, 54
          %s151 = smul.addr %s150, 8
          %s152 = scalar_lea.vmem %s0, %s151
        $region28: #{tpu_custom_call.1} parent=23 // pred_fallthru
          _
      $region24: #{tpu_custom_call.1} parent=5 // pred_fallthru
        _
      %p153 = scmp.le.s32.totalorder 1, %s12
      %p154 = scmp.lt.s32.totalorder %s12, 5
      %p155 = pnand %p153, %p154
      %p156 = pneg %p155
      // Predicated region
      $region29: #{tpu_custom_call.1} parent=5 // pred_check
        _
      $region30: #{tpu_custom_call.1} parent=5 // pred_check_branch
        %158 = sbr.rel (%p155) target = $region32
      $region31: #{tpu_custom_call.1} parent=5 // pred_region
        %s159 = ssub.s32 %s12, 1
        %p160 = scmp.lt.s32.totalorder %s21, 1
        %s161 = scalar_select %p160, %s21, 1
        %s162 = smul.addr %s161, 54
        %s163 = smul.addr %s162, 8
        %s164 = scalar_lea.vmem %s0, %s163
        %p165 = pneg %p50
        %p166 = pneg %p47
        %p167 = pneg %p71
        %p168 = pneg %p68
        %p169 = pneg %p92
        %p170 = pneg %p89
        %p171 = pneg %p120
        %p172 = pneg %p117
        %s173 = sand.u32 %s107, 1
        %s174 = scalar_lea.sflag [#allocation3], %s173
        %s175 = sand.u32 %s107, 1
        %s176 = smul.addr %s175, 8
        %s177 = scalar_lea.vmem [#allocation2], %s176
        %p178 = scmp.lt.s32.totalorder %s21, 1
        %s179 = scalar_select %p178, %s21, 1
        %s180 = smul.addr %s179, 54
        %s181 = smul.addr %s180, 8
        %s182 = scalar_lea.vmem %s0, %s181
        %s183 = smul.u32 %s22, 8
        %s184 = smul.u32 %s183, 24
        %s185 = scalar_lea.vmem %s182, %s184
        %v186 = vld [vmem:[%s185] sm:$0xff]
        %v187 = vld [vmem:[%s185 + $0x8] sm:$0xff]
        %v188 = vld [vmem:[%s185 + $0x10] sm:$0x3]
        %v189 = vld [vmem:[%s185 + $0x18] sm:$0xff]
        %v190 = vld [vmem:[%s185 + $0x20] sm:$0xff]
        %v191 = vld [vmem:[%s185 + $0x28] sm:$0x3]
        %v192 = vld [vmem:[%s185 + $0x30] sm:$0xff]
        %v193 = vld [vmem:[%s185 + $0x38] sm:$0xff]
        %v194 = vld [vmem:[%s185 + $0x40] sm:$0x3]
        %v195 = vld [vmem:[%s185 + $0x48] sm:$0xff]
        %v196 = vld [vmem:[%s185 + $0x50] sm:$0xff]
        %v197 = vld [vmem:[%s185 + $0x58] sm:$0x3]
        %v198 = vld [vmem:[%s185 + $0x60] sm:$0xff]
        %v199 = vld [vmem:[%s185 + $0x68] sm:$0xff]
        %v200 = vld [vmem:[%s185 + $0x70] sm:$0x3]
        %v201 = vld [vmem:[%s185 + $0x78] sm:$0xff]
        %v202 = vld [vmem:[%s185 + $0x80] sm:$0xff]
        %v203 = vld [vmem:[%s185 + $0x88] sm:$0x3]
        %v204 = vld [vmem:[%s185 + $0x90] sm:$0xff]
        %v205 = vld [vmem:[%s185 + $0x98] sm:$0xff]
        %v206 = vld [vmem:[%s185 + $0xa0] sm:$0x3]
        %v207 = vld [vmem:[%s185 + $0xa8] sm:$0xff]
        %v208 = vld [vmem:[%s185 + $0xb0] sm:$0xff]
        %v209 = vld [vmem:[%s185 + $0xb8] sm:$0x3]
        %v210 = vld [vmem:[%s185 + $0xc0] sm:$0xff]
        %v211 = vld [vmem:[%s185 + $0xc8] sm:$0xff]
        %v212 = vld [vmem:[%s185 + $0xd0] sm:$0x3]
        %v213 = vld [vmem:[%s185 + $0xd8] sm:$0xff]
        %v214 = vld [vmem:[%s185 + $0xe0] sm:$0xff]
        %v215 = vld [vmem:[%s185 + $0xe8] sm:$0x3]
        %vm240 = vcmask 1046528
        %v241 = vrot.slane %v186, 1
        %v242 = vrot.slane %v187, 1
        %v243 = vsel %vm240, %v241, %v242
        %v244 = vrot.slane %v188, 1
        %v245 = vsel %vm240, %v242, %v244
        %v246 = vrot.slane %v189, 1
        %v247 = vrot.slane %v190, 1
        %v248 = vsel %vm240, %v246, %v247
        %v249 = vrot.slane %v191, 1
        %v250 = vsel %vm240, %v247, %v249
        %v251 = vrot.slane %v192, 1
        %v252 = vrot.slane %v193, 1
        %v253 = vsel %vm240, %v251, %v252
        %v254 = vrot.slane %v194, 1
        %v255 = vsel %vm240, %v252, %v254
        %v256 = vrot.slane %v195, 1
        %v257 = vrot.slane %v196, 1
        %v258 = vsel %vm240, %v256, %v257
        %v259 = vrot.slane %v197, 1
        %v260 = vsel %vm240, %v257, %v259
        %v261 = vrot.slane %v198, 1
        %v262 = vrot.slane %v199, 1
        %v263 = vsel %vm240, %v261, %v262
        %v264 = vrot.slane %v200, 1
        %v265 = vsel %vm240, %v262, %v264
        %v266 = vrot.slane %v201, 1
        %v267 = vrot.slane %v202, 1
        %v268 = vsel %vm240, %v266, %v267
        %v269 = vrot.slane %v203, 1
        %v270 = vsel %vm240, %v267, %v269
        %v271 = vrot.slane %v204, 1
        %v272 = vrot.slane %v205, 1
        %v273 = vsel %vm240, %v271, %v272
        %v274 = vrot.slane %v206, 1
        %v275 = vsel %vm240, %v272, %v274
        %v276 = vrot.slane %v207, 1
        %v277 = vrot.slane %v208, 1
        %v278 = vsel %vm240, %v276, %v277
        %v279 = vrot.slane %v209, 1
        %v280 = vsel %vm240, %v277, %v279
        %vm281 = vcmask 1045504
        %v282 = vrot.slane %v186, 2
        %v283 = vrot.slane %v187, 2
        %v284 = vsel %vm281, %v282, %v283
        %v285 = vrot.slane %v188, 2
        %v286 = vsel %vm281, %v283, %v285
        %v287 = vrot.slane %v189, 2
        %v288 = vrot.slane %v190, 2
        %v289 = vsel %vm281, %v287, %v288
        %v290 = vrot.slane %v191, 2
        %v291 = vsel %vm281, %v288, %v290
        %v292 = vrot.slane %v192, 2
        %v293 = vrot.slane %v193, 2
        %v294 = vsel %vm281, %v292, %v293
        %v295 = vrot.slane %v194, 2
        %v296 = vsel %vm281, %v293, %v295
        %v297 = vrot.slane %v195, 2
        %v298 = vrot.slane %v196, 2
        %v299 = vsel %vm281, %v297, %v298
        %v300 = vrot.slane %v197, 2
        %v301 = vsel %vm281, %v298, %v300
        %v302 = vrot.slane %v198, 2
        %v303 = vrot.slane %v199, 2
        %v304 = vsel %vm281, %v302, %v303
        %v305 = vrot.slane %v200, 2
        %v306 = vsel %vm281, %v303, %v305
        %v307 = vrot.slane %v201, 2
        %v308 = vrot.slane %v202, 2
        %v309 = vsel %vm281, %v307, %v308
        %v310 = vrot.slane %v203, 2
        %v311 = vsel %vm281, %v308, %v310
        %v312 = vrot.slane %v204, 2
        %v313 = vrot.slane %v205, 2
        %v314 = vsel %vm281, %v312, %v313
        %v315 = vrot.slane %v206, 2
        %v316 = vsel %vm281, %v313, %v315
        %v317 = vrot.slane %v207, 2
        %v318 = vrot.slane %v208, 2
        %v319 = vsel %vm281, %v317, %v318
        %v320 = vrot.slane %v209, 2
        %v321 = vsel %vm281, %v318, %v320
        %v325 = vrot.slane %v210, 1
        %v326 = vrot.slane %v211, 1
        %v327 = vsel %vm240, %v325, %v326
        %v328 = vrot.slane %v212, 1
        %v329 = vsel %vm240, %v326, %v328
        %v330 = vrot.slane %v210, 2
        %v331 = vrot.slane %v211, 2
        %v332 = vsel %vm281, %v330, %v331
        %v333 = vrot.slane %v212, 2
        %v334 = vsel %vm281, %v331, %v333
        %v338 = vrot.slane %v213, 1
        %v339 = vrot.slane %v214, 1
        %v340 = vsel %vm240, %v338, %v339
        %v341 = vrot.slane %v215, 1
        %v342 = vsel %vm240, %v339, %v341
        %v343 = vrot.slane %v213, 2
        %v344 = vrot.slane %v214, 2
        %v345 = vsel %vm281, %v343, %v344
        %v346 = vrot.slane %v215, 2
        %v347 = vsel %vm281, %v344, %v346
        %348 = vrot.lane.b32.xlu0 %v243, 4
        %v349 = vpop.permute.xlu0 %348
        %350 = vrot.lane.b32.xlu0 %v245, 4
        %v351 = vpop.permute.xlu0 %350
        %352 = vrot.lane.b32.xlu0 %v248, 4
        %v353 = vpop.permute.xlu0 %352
        %354 = vrot.lane.b32.xlu0 %v250, 4
        %v355 = vpop.permute.xlu0 %354
        %356 = vrot.lane.b32.xlu0 %v253, 4
        %v357 = vpop.permute.xlu0 %356
        %358 = vrot.lane.b32.xlu0 %v255, 4
        %v359 = vpop.permute.xlu0 %358
        %360 = vrot.lane.b32.xlu0 %v258, 4
        %v361 = vpop.permute.xlu0 %360
        %362 = vrot.lane.b32.xlu0 %v260, 4
        %v363 = vpop.permute.xlu0 %362
        %364 = vrot.lane.b32.xlu0 %v263, 4
        %v365 = vpop.permute.xlu0 %364
        %366 = vrot.lane.b32.xlu0 %v265, 4
        %v367 = vpop.permute.xlu0 %366
        %368 = vrot.lane.b32.xlu0 %v268, 4
        %v369 = vpop.permute.xlu0 %368
        %370 = vrot.lane.b32.xlu0 %v270, 4
        %v371 = vpop.permute.xlu0 %370
        %372 = vrot.lane.b32.xlu0 %v273, 4
        %v373 = vpop.permute.xlu0 %372
        %374 = vrot.lane.b32.xlu0 %v275, 4
        %v375 = vpop.permute.xlu0 %374
        %376 = vrot.lane.b32.xlu0 %v278, 4
        %v377 = vpop.permute.xlu0 %376
        %378 = vrot.lane.b32.xlu0 %v280, 4
        %v379 = vpop.permute.xlu0 %378
        %396 = vrot.lane.b32.xlu0 %v284, 8
        %v397 = vpop.permute.xlu0 %396
        %398 = vrot.lane.b32.xlu0 %v286, 8
        %v399 = vpop.permute.xlu0 %398
        %400 = vrot.lane.b32.xlu0 %v289, 8
        %v401 = vpop.permute.xlu0 %400
        %402 = vrot.lane.b32.xlu0 %v291, 8
        %v403 = vpop.permute.xlu0 %402
        %404 = vrot.lane.b32.xlu0 %v294, 8
        %v405 = vpop.permute.xlu0 %404
        %406 = vrot.lane.b32.xlu0 %v296, 8
        %v407 = vpop.permute.xlu0 %406
        %408 = vrot.lane.b32.xlu0 %v299, 8
        %v409 = vpop.permute.xlu0 %408
        %410 = vrot.lane.b32.xlu0 %v301, 8
        %v411 = vpop.permute.xlu0 %410
        %412 = vrot.lane.b32.xlu0 %v304, 8
        %v413 = vpop.permute.xlu0 %412
        %414 = vrot.lane.b32.xlu0 %v306, 8
        %v415 = vpop.permute.xlu0 %414
        %416 = vrot.lane.b32.xlu0 %v309, 8
        %v417 = vpop.permute.xlu0 %416
        %418 = vrot.lane.b32.xlu0 %v311, 8
        %v419 = vpop.permute.xlu0 %418
        %420 = vrot.lane.b32.xlu0 %v314, 8
        %v421 = vpop.permute.xlu0 %420
        %422 = vrot.lane.b32.xlu0 %v316, 8
        %v423 = vpop.permute.xlu0 %422
        %424 = vrot.lane.b32.xlu0 %v319, 8
        %v425 = vpop.permute.xlu0 %424
        %426 = vrot.lane.b32.xlu0 %v321, 8
        %v427 = vpop.permute.xlu0 %426
        %444 = vrot.lane.b32.xlu0 %v189, 12
        %v445 = vpop.permute.xlu0 %444
        %446 = vrot.lane.b32.xlu0 %v190, 12
        %v447 = vpop.permute.xlu0 %446
        %448 = vrot.lane.b32.xlu0 %v192, 12
        %v449 = vpop.permute.xlu0 %448
        %450 = vrot.lane.b32.xlu0 %v193, 12
        %v451 = vpop.permute.xlu0 %450
        %452 = vrot.lane.b32.xlu0 %v195, 12
        %v453 = vpop.permute.xlu0 %452
        %454 = vrot.lane.b32.xlu0 %v196, 12
        %v455 = vpop.permute.xlu0 %454
        %456 = vrot.lane.b32.xlu0 %v198, 12
        %v457 = vpop.permute.xlu0 %456
        %458 = vrot.lane.b32.xlu0 %v199, 12
        %v459 = vpop.permute.xlu0 %458
        %460 = vrot.lane.b32.xlu0 %v201, 12
        %v461 = vpop.permute.xlu0 %460
        %462 = vrot.lane.b32.xlu0 %v202, 12
        %v463 = vpop.permute.xlu0 %462
        %464 = vrot.lane.b32.xlu0 %v204, 12
        %v465 = vpop.permute.xlu0 %464
        %466 = vrot.lane.b32.xlu0 %v205, 12
        %v467 = vpop.permute.xlu0 %466
        %468 = vrot.lane.b32.xlu0 %v207, 12
        %v469 = vpop.permute.xlu0 %468
        %470 = vrot.lane.b32.xlu0 %v208, 12
        %v471 = vpop.permute.xlu0 %470
        %472 = vrot.lane.b32.xlu0 %v210, 12
        %v473 = vpop.permute.xlu0 %472
        %474 = vrot.lane.b32.xlu0 %v211, 12
        %v475 = vpop.permute.xlu0 %474
        %492 = vrot.lane.b32.xlu0 %v248, 16
        %v493 = vpop.permute.xlu0 %492
        %494 = vrot.lane.b32.xlu0 %v250, 16
        %v495 = vpop.permute.xlu0 %494
        %496 = vrot.lane.b32.xlu0 %v253, 16
        %v497 = vpop.permute.xlu0 %496
        %498 = vrot.lane.b32.xlu0 %v255, 16
        %v499 = vpop.permute.xlu0 %498
        %500 = vrot.lane.b32.xlu0 %v258, 16
        %v501 = vpop.permute.xlu0 %500
        %502 = vrot.lane.b32.xlu0 %v260, 16
        %v503 = vpop.permute.xlu0 %502
        %504 = vrot.lane.b32.xlu0 %v263, 16
        %v505 = vpop.permute.xlu0 %504
        %506 = vrot.lane.b32.xlu0 %v265, 16
        %v507 = vpop.permute.xlu0 %506
        %508 = vrot.lane.b32.xlu0 %v268, 16
        %v509 = vpop.permute.xlu0 %508
        %510 = vrot.lane.b32.xlu0 %v270, 16
        %v511 = vpop.permute.xlu0 %510
        %512 = vrot.lane.b32.xlu0 %v273, 16
        %v513 = vpop.permute.xlu0 %512
        %514 = vrot.lane.b32.xlu0 %v275, 16
        %v515 = vpop.permute.xlu0 %514
        %516 = vrot.lane.b32.xlu0 %v278, 16
        %v517 = vpop.permute.xlu0 %516
        %518 = vrot.lane.b32.xlu0 %v280, 16
        %v519 = vpop.permute.xlu0 %518
        %520 = vrot.lane.b32.xlu0 %v327, 16
        %v521 = vpop.permute.xlu0 %520
        %522 = vrot.lane.b32.xlu0 %v329, 16
        %v523 = vpop.permute.xlu0 %522
        %540 = vrot.lane.b32.xlu0 %v289, 20
        %v541 = vpop.permute.xlu0 %540
        %542 = vrot.lane.b32.xlu0 %v291, 20
        %v543 = vpop.permute.xlu0 %542
        %544 = vrot.lane.b32.xlu0 %v294, 20
        %v545 = vpop.permute.xlu0 %544
        %546 = vrot.lane.b32.xlu0 %v296, 20
        %v547 = vpop.permute.xlu0 %546
        %548 = vrot.lane.b32.xlu0 %v299, 20
        %v549 = vpop.permute.xlu0 %548
        %550 = vrot.lane.b32.xlu0 %v301, 20
        %v551 = vpop.permute.xlu0 %550
        %552 = vrot.lane.b32.xlu0 %v304, 20
        %v553 = vpop.permute.xlu0 %552
        %554 = vrot.lane.b32.xlu0 %v306, 20
        %v555 = vpop.permute.xlu0 %554
        %556 = vrot.lane.b32.xlu0 %v309, 20
        %v557 = vpop.permute.xlu0 %556
        %558 = vrot.lane.b32.xlu0 %v311, 20
        %v559 = vpop.permute.xlu0 %558
        %560 = vrot.lane.b32.xlu0 %v314, 20
        %v561 = vpop.permute.xlu0 %560
        %562 = vrot.lane.b32.xlu0 %v316, 20
        %v563 = vpop.permute.xlu0 %562
        %564 = vrot.lane.b32.xlu0 %v319, 20
        %v565 = vpop.permute.xlu0 %564
        %566 = vrot.lane.b32.xlu0 %v321, 20
        %v567 = vpop.permute.xlu0 %566
        %568 = vrot.lane.b32.xlu0 %v332, 20
        %v569 = vpop.permute.xlu0 %568
        %570 = vrot.lane.b32.xlu0 %v334, 20
        %v571 = vpop.permute.xlu0 %570
        %588 = vrot.lane.b32.xlu0 %v192, 24
        %v589 = vpop.permute.xlu0 %588
        %590 = vrot.lane.b32.xlu0 %v193, 24
        %v591 = vpop.permute.xlu0 %590
        %592 = vrot.lane.b32.xlu0 %v195, 24
        %v593 = vpop.permute.xlu0 %592
        %594 = vrot.lane.b32.xlu0 %v196, 24
        %v595 = vpop.permute.xlu0 %594
        %596 = vrot.lane.b32.xlu0 %v198, 24
        %v597 = vpop.permute.xlu0 %596
        %598 = vrot.lane.b32.xlu0 %v199, 24
        %v599 = vpop.permute.xlu0 %598
        %600 = vrot.lane.b32.xlu0 %v201, 24
        %v601 = vpop.permute.xlu0 %600
        %602 = vrot.lane.b32.xlu0 %v202, 24
        %v603 = vpop.permute.xlu0 %602
        %604 = vrot.lane.b32.xlu0 %v204, 24
        %v605 = vpop.permute.xlu0 %604
        %606 = vrot.lane.b32.xlu0 %v205, 24
        %v607 = vpop.permute.xlu0 %606
        %608 = vrot.lane.b32.xlu0 %v207, 24
        %v609 = vpop.permute.xlu0 %608
        %610 = vrot.lane.b32.xlu0 %v208, 24
        %v611 = vpop.permute.xlu0 %610
        %612 = vrot.lane.b32.xlu0 %v210, 24
        %v613 = vpop.permute.xlu0 %612
        %614 = vrot.lane.b32.xlu0 %v211, 24
        %v615 = vpop.permute.xlu0 %614
        %616 = vrot.lane.b32.xlu0 %v213, 24
        %v617 = vpop.permute.xlu0 %616
        %618 = vrot.lane.b32.xlu0 %v214, 24
        %v619 = vpop.permute.xlu0 %618
        %636 = vrot.lane.b32.xlu0 %v253, 28
        %v637 = vpop.permute.xlu0 %636
        %638 = vrot.lane.b32.xlu0 %v255, 28
        %v639 = vpop.permute.xlu0 %638
        %640 = vrot.lane.b32.xlu0 %v258, 28
        %v641 = vpop.permute.xlu0 %640
        %642 = vrot.lane.b32.xlu0 %v260, 28
        %v643 = vpop.permute.xlu0 %642
        %644 = vrot.lane.b32.xlu0 %v263, 28
        %v645 = vpop.permute.xlu0 %644
        %646 = vrot.lane.b32.xlu0 %v265, 28
        %v647 = vpop.permute.xlu0 %646
        %648 = vrot.lane.b32.xlu0 %v268, 28
        %v649 = vpop.permute.xlu0 %648
        %650 = vrot.lane.b32.xlu0 %v270, 28
        %v651 = vpop.permute.xlu0 %650
        %652 = vrot.lane.b32.xlu0 %v273, 28
        %v653 = vpop.permute.xlu0 %652
        %654 = vrot.lane.b32.xlu0 %v275, 28
        %v655 = vpop.permute.xlu0 %654
        %656 = vrot.lane.b32.xlu0 %v278, 28
        %v657 = vpop.permute.xlu0 %656
        %658 = vrot.lane.b32.xlu0 %v280, 28
        %v659 = vpop.permute.xlu0 %658
        %660 = vrot.lane.b32.xlu0 %v327, 28
        %v661 = vpop.permute.xlu0 %660
        %662 = vrot.lane.b32.xlu0 %v329, 28
        %v663 = vpop.permute.xlu0 %662
        %664 = vrot.lane.b32.xlu0 %v340, 28
        %v665 = vpop.permute.xlu0 %664
        %666 = vrot.lane.b32.xlu0 %v342, 28
        %v667 = vpop.permute.xlu0 %666
        %684 = vrot.lane.b32.xlu0 %v294, 32
        %v685 = vpop.permute.xlu0 %684
        %686 = vrot.lane.b32.xlu0 %v296, 32
        %v687 = vpop.permute.xlu0 %686
        %688 = vrot.lane.b32.xlu0 %v299, 32
        %v689 = vpop.permute.xlu0 %688
        %690 = vrot.lane.b32.xlu0 %v301, 32
        %v691 = vpop.permute.xlu0 %690
        %692 = vrot.lane.b32.xlu0 %v304, 32
        %v693 = vpop.permute.xlu0 %692
        %694 = vrot.lane.b32.xlu0 %v306, 32
        %v695 = vpop.permute.xlu0 %694
        %696 = vrot.lane.b32.xlu0 %v309, 32
        %v697 = vpop.permute.xlu0 %696
        %698 = vrot.lane.b32.xlu0 %v311, 32
        %v699 = vpop.permute.xlu0 %698
        %700 = vrot.lane.b32.xlu0 %v314, 32
        %v701 = vpop.permute.xlu0 %700
        %702 = vrot.lane.b32.xlu0 %v316, 32
        %v703 = vpop.permute.xlu0 %702
        %704 = vrot.lane.b32.xlu0 %v319, 32
        %v705 = vpop.permute.xlu0 %704
        %706 = vrot.lane.b32.xlu0 %v321, 32
        %v707 = vpop.permute.xlu0 %706
        %708 = vrot.lane.b32.xlu0 %v332, 32
        %v709 = vpop.permute.xlu0 %708
        %710 = vrot.lane.b32.xlu0 %v334, 32
        %v711 = vpop.permute.xlu0 %710
        %712 = vrot.lane.b32.xlu0 %v345, 32
        %v713 = vpop.permute.xlu0 %712
        %714 = vrot.lane.b32.xlu0 %v347, 32
        %v715 = vpop.permute.xlu0 %714
        %vm732 = vcmask 31744
        %v733 = vsel %vm732, %v186, %v349
        %v734 = vsel %vm732, %v187, %v351
        %v735 = vsel %vm732, %v189, %v353
        %v736 = vsel %vm732, %v190, %v355
        %v737 = vsel %vm732, %v192, %v357
        %v738 = vsel %vm732, %v193, %v359
        %v739 = vsel %vm732, %v195, %v361
        %v740 = vsel %vm732, %v196, %v363
        %v741 = vsel %vm732, %v198, %v365
        %v742 = vsel %vm732, %v199, %v367
        %v743 = vsel %vm732, %v201, %v369
        %v744 = vsel %vm732, %v202, %v371
        %v745 = vsel %vm732, %v204, %v373
        %v746 = vsel %vm732, %v205, %v375
        %v747 = vsel %vm732, %v207, %v377
        %v748 = vsel %vm732, %v208, %v379
        %vm749 = vcmask 64512
        %v750 = vsel %vm749, %v733, %v397
        %v751 = vsel %vm749, %v734, %v399
        %v752 = vsel %vm749, %v735, %v401
        %v753 = vsel %vm749, %v736, %v403
        %v754 = vsel %vm749, %v737, %v405
        %v755 = vsel %vm749, %v738, %v407
        %v756 = vsel %vm749, %v739, %v409
        %v757 = vsel %vm749, %v740, %v411
        %v758 = vsel %vm749, %v741, %v413
        %v759 = vsel %vm749, %v742, %v415
        %v760 = vsel %vm749, %v743, %v417
        %v761 = vsel %vm749, %v744, %v419
        %v762 = vsel %vm749, %v745, %v421
        %v763 = vsel %vm749, %v746, %v423
        %v764 = vsel %vm749, %v747, %v425
        %v765 = vsel %vm749, %v748, %v427
        %vm766 = vcmask 97280
        %v767 = vsel %vm766, %v750, %v445
        %v768 = vsel %vm766, %v751, %v447
        %v769 = vsel %vm766, %v752, %v449
        %v770 = vsel %vm766, %v753, %v451
        %v771 = vsel %vm766, %v754, %v453
        %v772 = vsel %vm766, %v755, %v455
        %v773 = vsel %vm766, %v756, %v457
        %v774 = vsel %vm766, %v757, %v459
        %v775 = vsel %vm766, %v758, %v461
        %v776 = vsel %vm766, %v759, %v463
        %v777 = vsel %vm766, %v760, %v465
        %v778 = vsel %vm766, %v761, %v467
        %v779 = vsel %vm766, %v762, %v469
        %v780 = vsel %vm766, %v763, %v471
        %v781 = vsel %vm766, %v764, %v473
        %v782 = vsel %vm766, %v765, %v475
        %vm783 = vcmask 130048
        %v784 = vsel %vm783, %v767, %v493
        %v785 = vsel %vm783, %v768, %v495
        %v786 = vsel %vm783, %v769, %v497
        %v787 = vsel %vm783, %v770, %v499
        %v788 = vsel %vm783, %v771, %v501
        %v789 = vsel %vm783, %v772, %v503
        %v790 = vsel %vm783, %v773, %v505
        %v791 = vsel %vm783, %v774, %v507
        %v792 = vsel %vm783, %v775, %v509
        %v793 = vsel %vm783, %v776, %v511
        %v794 = vsel %vm783, %v777, %v513
        %v795 = vsel %vm783, %v778, %v515
        %v796 = vsel %vm783, %v779, %v517
        %v797 = vsel %vm783, %v780, %v519
        %v798 = vsel %vm783, %v781, %v521
        %v799 = vsel %vm783, %v782, %v523
        %vm800 = vcmask 162816
        %v801 = vsel %vm800, %v784, %v541
        %v802 = vsel %vm800, %v785, %v543
        %v803 = vsel %vm800, %v786, %v545
        %v804 = vsel %vm800, %v787, %v547
        %v805 = vsel %vm800, %v788, %v549
        %v806 = vsel %vm800, %v789, %v551
        %v807 = vsel %vm800, %v790, %v553
        %v808 = vsel %vm800, %v791, %v555
        %v809 = vsel %vm800, %v792, %v557
        %v810 = vsel %vm800, %v793, %v559
        %v811 = vsel %vm800, %v794, %v561
        %v812 = vsel %vm800, %v795, %v563
        %v813 = vsel %vm800, %v796, %v565
        %v814 = vsel %vm800, %v797, %v567
        %v815 = vsel %vm800, %v798, %v569
        %v816 = vsel %vm800, %v799, %v571
        %vm817 = vcmask 195584
        %v818 = vsel %vm817, %v801, %v589
        %v819 = vsel %vm817, %v802, %v591
        %v820 = vsel %vm817, %v803, %v593
        %v821 = vsel %vm817, %v804, %v595
        %v822 = vsel %vm817, %v805, %v597
        %v823 = vsel %vm817, %v806, %v599
        %v824 = vsel %vm817, %v807, %v601
        %v825 = vsel %vm817, %v808, %v603
        %v826 = vsel %vm817, %v809, %v605
        %v827 = vsel %vm817, %v810, %v607
        %v828 = vsel %vm817, %v811, %v609
        %v829 = vsel %vm817, %v812, %v611
        %v830 = vsel %vm817, %v813, %v613
        %v831 = vsel %vm817, %v814, %v615
        %v832 = vsel %vm817, %v815, %v617
        %v833 = vsel %vm817, %v816, %v619
        %vm834 = vcmask 228352
        %v835 = vsel %vm834, %v818, %v637
        %v836 = vsel %vm834, %v819, %v639
        %v837 = vsel %vm834, %v820, %v641
        %v838 = vsel %vm834, %v821, %v643
        %v839 = vsel %vm834, %v822, %v645
        %v840 = vsel %vm834, %v823, %v647
        %v841 = vsel %vm834, %v824, %v649
        %v842 = vsel %vm834, %v825, %v651
        %v843 = vsel %vm834, %v826, %v653
        %v844 = vsel %vm834, %v827, %v655
        %v845 = vsel %vm834, %v828, %v657
        %v846 = vsel %vm834, %v829, %v659
        %v847 = vsel %vm834, %v830, %v661
        %v848 = vsel %vm834, %v831, %v663
        %v849 = vsel %vm834, %v832, %v665
        %v850 = vsel %vm834, %v833, %v667
        %vm851 = vcmask 261120
        %v852 = vsel %vm851, %v835, %v685
        %v853 = vsel %vm851, %v836, %v687
        %v854 = vsel %vm851, %v837, %v689
        %v855 = vsel %vm851, %v838, %v691
        %v856 = vsel %vm851, %v839, %v693
        %v857 = vsel %vm851, %v840, %v695
        %v858 = vsel %vm851, %v841, %v697
        %v859 = vsel %vm851, %v842, %v699
        %v860 = vsel %vm851, %v843, %v701
        %v861 = vsel %vm851, %v844, %v703
        %v862 = vsel %vm851, %v845, %v705
        %v863 = vsel %vm851, %v846, %v707
        %v864 = vsel %vm851, %v847, %v709
        %v865 = vsel %vm851, %v848, %v711
        %v866 = vsel %vm851, %v849, %v713
        %v867 = vsel %vm851, %v850, %v715
        %v868 = vld [vmem:[%s1] sm:$0xff]
        %v869 = vld [vmem:[%s1 + $0x8] sm:$0xff]
        %v870 = vld [vmem:[%s1 + $0x10] sm:$0xff]
        %v871 = vld [vmem:[%s1 + $0x18] sm:$0xff]
        %v872 = vld [vmem:[%s1 + $0x20] sm:$0xf]
        %v873 = vld [vmem:[%s2] sm:$0x1]
        %v875 = vlaneseq
        %v876 = vshrl.u32 %v875, 7
        %v877 = vsub.s32 0, %v876
        %v878 = vrot.slane %v873, %v877
        %vm880 = vcmask 293888
        %v882 = vsel %vm880, %v852, 0
        %v885 = vsel %vm880, %v853, 0
        %v888 = vsel %vm880, %v854, 0
        %v891 = vsel %vm880, %v855, 0
        %v894 = vsel %vm880, %v856, 0
        %v897 = vsel %vm880, %v857, 0
        %v900 = vsel %vm880, %v858, 0
        %v903 = vsel %vm880, %v859, 0
        %v906 = vsel %vm880, %v860, 0
        %v909 = vsel %vm880, %v861, 0
        %v912 = vsel %vm880, %v862, 0
        %v915 = vsel %vm880, %v863, 0
        %v918 = vsel %vm880, %v864, 0
        %v921 = vsel %vm880, %v865, 0
        %v924 = vsel %vm880, %v866, 0
        %v927 = vsel %vm880, %v867, 0
        %vm929 = vcmask 1043456
        %v931 = vsel %vm929, %v872, 0
        %933 = vmatprep.subr.mxu0 0.0
        %934 = vmatpush1.msra.mxu0 %v868
        %935 = vmatprep.subr.mxu0 0.0
        %936 = vmatpush1.msra.mxu0 %v869
        %937 = vmatprep.subr.mxu0 0.0
        %938 = vmatpush1.msra.mxu0 %v870
        %939 = vmatprep.subr.mxu0 0.0
        %940 = vmatpush1.msra.mxu0 %v871
        %941 = vmatprep.subr.mxu0 0.0
        %942 = vmatpush1.msra.mxu0 %v931
        %943 = vmatprep.subr.mxu0 0.0
        %944 = vmatpush1.msra.mxu0 0.0
        %945 = vmatprep.subr.mxu0 0.0
        %946 = vmatpush1.msra.mxu0 0.0
        %947 = vmatprep.subr.mxu0 0.0
        %948 = vmatpush1.msra.mxu0 0.0
        %949 = vmatprep.subr.mxu0 0.0
        %950 = vmatpush1.msra.mxu0 0.0
        %951 = vmatprep.subr.mxu0 0.0
        %952 = vmatpush1.msra.mxu0 0.0
        %953 = vmatprep.subr.mxu0 0.0
        %954 = vmatpush1.msra.mxu0 0.0
        %955 = vmatprep.subr.mxu0 0.0
        %956 = vmatpush1.msra.mxu0 0.0
        %957 = vmatprep.subr.mxu0 0.0
        %958 = vmatpush1.msra.mxu0 0.0
        %959 = vmatprep.subr.mxu0 0.0
        %960 = vmatpush1.msra.mxu0 0.0
        %961 = vmatprep.subr.mxu0 0.0
        %962 = vmatpush1.msra.mxu0 0.0
        %963 = vmatprep.subr.mxu0 0.0
        %964 = vmatpush1.msra.mxu0 0.0
        %965 = vmatprep.subr.mxu0 0.0
        %966 = vmatpush1.msra.mxu0 0.0
        %967 = vmatprep.subr.mxu0 0.0
        %968 = vmatpush1.msra.mxu0 0.0
        %969 = vmatprep.subr.mxu0 0.0
        %970 = vmatpush1.msra.mxu0 0.0
        %971 = vmatprep.subr.mxu0 0.0
        %972 = vmatpush1.msra.mxu0 0.0
        %973 = vmatprep.subr.mxu0 0.0
        %974 = vmatpush1.msra.mxu0 0.0
        %975 = vmatprep.subr.mxu0 0.0
        %976 = vmatpush1.msra.mxu0 0.0
        %977 = vmatprep.subr.mxu0 0.0
        %978 = vmatpush1.msra.mxu0 0.0
        %979 = vmatprep.subr.mxu0 0.0
        %980 = vmatpush1.msra.mxu0 0.0
        %981 = vmatprep.subr.mxu0 0.0
        %982 = vmatpush1.msra.mxu0 0.0
        %983 = vmatprep.subr.mxu0 0.0
        %984 = vmatpush1.msra.mxu0 0.0
        %985 = vmatprep.subr.mxu0 0.0
        %986 = vmatpush1.msra.mxu0 0.0
        %987 = vmatprep.subr.mxu0 0.0
        %988 = vmatpush1.msra.mxu0 0.0
        %989 = vmatprep.subr.mxu0 0.0
        %990 = vmatpush1.msra.mxu0 0.0
        %991 = vmatprep.subr.mxu0 0.0
        %992 = vmatpush1.msra.mxu0 0.0
        %993 = vmatprep.subr.mxu0 0.0
        %994 = vmatpush1.msra.mxu0 0.0
        %995 = vmatprep.subr.mxu0 0.0
        %996 = vmatpush1.msra.mxu0 0.0
        %997 = vmatprep.mubr.f32.mxu0 0.0
        %998 = vmatmul.mubr.f32.gmra.mrb[0].mxu0 %v882
        %v999 = vpop.f32.mrb[0].mxu0
        %v1000 = vadd.f32 %v878, %v999
        %v1001 = vpop.f32.mrb[0].mxu0
        %1002 = vmatprep.mubr.f32.mxu0 0.0
        %1003 = vmatmul.mubr.f32.gmra.mrb[0].mxu0 %v885
        %v1004 = vpop.f32.mrb[0].mxu0
        %v1005 = vadd.f32 %v878, %v1004
        %v1006 = vpop.f32.mrb[0].mxu0
        %1007 = vmatprep.mubr.f32.mxu0 0.0
        %1008 = vmatmul.mubr.f32.gmra.mrb[0].mxu0 %v888
        %v1009 = vpop.f32.mrb[0].mxu0
        %v1010 = vadd.f32 %v878, %v1009
        %v1011 = vpop.f32.mrb[0].mxu0
        %1012 = vmatprep.mubr.f32.mxu0 0.0
        %1013 = vmatmul.mubr.f32.gmra.mrb[0].mxu0 %v891
        %v1014 = vpop.f32.mrb[0].mxu0
        %v1015 = vadd.f32 %v878, %v1014
        %v1016 = vpop.f32.mrb[0].mxu0
        %1017 = vmatprep.mubr.f32.mxu0 0.0
        %1018 = vmatmul.mubr.f32.gmra.mrb[0].mxu0 %v894
        %v1019 = vpop.f32.mrb[0].mxu0
        %v1020 = vadd.f32 %v878, %v1019
        %v1021 = vpop.f32.mrb[0].mxu0
        %1022 = vmatprep.mubr.f32.mxu0 0.0
        %1023 = vmatmul.mubr.f32.gmra.mrb[0].mxu0 %v897
        %v1024 = vpop.f32.mrb[0].mxu0
        %v1025 = vadd.f32 %v878, %v1024
        %v1026 = vpop.f32.mrb[0].mxu0
        %1027 = vmatprep.mubr.f32.mxu0 0.0
        %1028 = vmatmul.mubr.f32.gmra.mrb[0].mxu0 %v900
        %v1029 = vpop.f32.mrb[0].mxu0
        %v1030 = vadd.f32 %v878, %v1029
        %v1031 = vpop.f32.mrb[0].mxu0
        %1032 = vmatprep.mubr.f32.mxu0 0.0
        %1033 = vmatmul.mubr.f32.gmra.mrb[0].mxu0 %v903
        %v1034 = vpop.f32.mrb[0].mxu0
        %v1035 = vadd.f32 %v878, %v1034
        %v1036 = vpop.f32.mrb[0].mxu0
        %1037 = vmatprep.mubr.f32.mxu0 0.0
        %1038 = vmatmul.mubr.f32.gmra.mrb[0].mxu0 %v906
        %v1039 = vpop.f32.mrb[0].mxu0
        %v1040 = vadd.f32 %v878, %v1039
        %v1041 = vpop.f32.mrb[0].mxu0
        %1042 = vmatprep.mubr.f32.mxu0 0.0
        %1043 = vmatmul.mubr.f32.gmra.mrb[0].mxu0 %v909
        %v1044 = vpop.f32.mrb[0].mxu0
        %v1045 = vadd.f32 %v878, %v1044
        %v1046 = vpop.f32.mrb[0].mxu0
        %1047 = vmatprep.mubr.f32.mxu0 0.0
        %1048 = vmatmul.mubr.f32.gmra.mrb[0].mxu0 %v912
        %v1049 = vpop.f32.mrb[0].mxu0
        %v1050 = vadd.f32 %v878, %v1049
        %v1051 = vpop.f32.mrb[0].mxu0
        %1052 = vmatprep.mubr.f32.mxu0 0.0
        %1053 = vmatmul.mubr.f32.gmra.mrb[0].mxu0 %v915
        %v1054 = vpop.f32.mrb[0].mxu0
        %v1055 = vadd.f32 %v878, %v1054
        %v1056 = vpop.f32.mrb[0].mxu0
        %1057 = vmatprep.mubr.f32.mxu0 0.0
        %1058 = vmatmul.mubr.f32.gmra.mrb[0].mxu0 %v918
        %v1059 = vpop.f32.mrb[0].mxu0
        %v1060 = vadd.f32 %v878, %v1059
        %v1061 = vpop.f32.mrb[0].mxu0
        %1062 = vmatprep.mubr.f32.mxu0 0.0
        %1063 = vmatmul.mubr.f32.gmra.mrb[0].mxu0 %v921
        %v1064 = vpop.f32.mrb[0].mxu0
        %v1065 = vadd.f32 %v878, %v1064
        %v1066 = vpop.f32.mrb[0].mxu0
        %1067 = vmatprep.mubr.f32.mxu0 0.0
        %1068 = vmatmul.mubr.f32.gmra.mrb[0].mxu0 %v924
        %v1069 = vpop.f32.mrb[0].mxu0
        %v1070 = vadd.f32 %v878, %v1069
        %v1071 = vpop.f32.mrb[0].mxu0
        %1072 = vmatprep.mubr.f32.mxu0 0.0
        %1073 = vmatmul.mubr.f32.gmra.mrb[0].mxu0 %v927
        %v1074 = vpop.f32.mrb[0].mxu0
        %v1075 = vadd.f32 %v878, %v1074
        %v1076 = vpop.f32.mrb[0].mxu0
        %1077 = vdwg.mxu0
        %v1078 = vmax.f32 %v1000, 0.0
        %v1079 = vmax.f32 %v1005, 0.0
        %v1080 = vmax.f32 %v1010, 0.0
        %v1081 = vmax.f32 %v1015, 0.0
        %v1082 = vmax.f32 %v1020, 0.0
        %v1083 = vmax.f32 %v1025, 0.0
        %v1084 = vmax.f32 %v1030, 0.0
        %v1085 = vmax.f32 %v1035, 0.0
        %v1086 = vmax.f32 %v1040, 0.0
        %v1087 = vmax.f32 %v1045, 0.0
        %v1088 = vmax.f32 %v1050, 0.0
        %v1089 = vmax.f32 %v1055, 0.0
        %v1090 = vmax.f32 %v1060, 0.0
        %v1091 = vmax.f32 %v1065, 0.0
        %v1092 = vmax.f32 %v1070, 0.0
        %v1093 = vmax.f32 %v1075, 0.0
        %1094 = vxpose.xlu0.b32.start [1/16] %v1078, 128
        %1095 = vxpose.xlu0.b32.cont [2/16] %v1079, 128
        %1096 = vxpose.xlu0.b32.cont [3/16] %v1080, 128
        %1097 = vxpose.xlu0.b32.cont [4/16] %v1081, 128
        %1098 = vxpose.xlu0.b32.cont [5/16] %v1082, 128
        %1099 = vxpose.xlu0.b32.cont [6/16] %v1083, 128
        %1100 = vxpose.xlu0.b32.cont [7/16] %v1084, 128
        %1101 = vxpose.xlu0.b32.cont [8/16] %v1085, 128
        %1102 = vxpose.xlu0.b32.cont [9/16] %v1086, 128
        %1103 = vxpose.xlu0.b32.cont [10/16] %v1087, 128
        %1104 = vxpose.xlu0.b32.cont [11/16] %v1088, 128
        %1105 = vxpose.xlu0.b32.cont [12/16] %v1089, 128
        %1106 = vxpose.xlu0.b32.cont [13/16] %v1090, 128
        %1107 = vxpose.xlu0.b32.cont [14/16] %v1091, 128
        %1108 = vxpose.xlu0.b32.cont [15/16] %v1092, 128
        %1109 = vxpose.xlu0.b32.end [16/16] %v1093, 128
        %v1110 = vpop.trf.xlu0
        %v1111 = vpop.trf.xlu0
        %v1112 = vpop.trf.xlu0
        %v1113 = vpop.trf.xlu0
        %v1114 = vpop.trf.xlu0
        %v1115 = vpop.trf.xlu0
        %v1116 = vpop.trf.xlu0
        %v1117 = vpop.trf.xlu0
        %v1118 = vpop.trf.xlu0
        %v1119 = vpop.trf.xlu0
        %v1120 = vpop.trf.xlu0
        %v1121 = vpop.trf.xlu0
        %v1122 = vpop.trf.xlu0
        %v1123 = vpop.trf.xlu0
        %v1124 = vpop.trf.xlu0
        %v1125 = vpop.trf.xlu0
        %1126 = vst [vmem:[%s177] sm:$0xff] %v1110
        %s1127 = sand.u32 %s107, 1
        %s1128 = scalar_lea.sflag [#allocation3], %s1127
        %s1129 = sand.u32 %s107, 1
        %s1130 = smul.addr %s1129, 8
        %s1131 = scalar_lea.vmem [#allocation2], %s1130
        // Predicated region
        $region33: #{tpu_custom_call.1} parent=31 // pred_check
          %p1132 = pneg %p117
        $region34: #{tpu_custom_call.1} parent=31 // pred_check_branch
          %1134 = sbr.rel (%p1132) target = $region36
        $region35: #{tpu_custom_call.1} parent=31 // pred_region
          %s1136 = ssub.s32 128, 128
          %1137 = vsyncadd %s1128, %s1136
          %s1138 = smul.addr %s21, 2
          %s1139 = sadd.s32 %s22, %s1138
          %s1140 = smul.addr %s1139, 128
          %s1141 = scalar_lea.hbm %s3, %s1140
          %s1143 = sshll.u32 %s1131, 4
          %s1144 = int_to_ptr.vmem [resolvable:$true] %s1143
          %1146 = dma.vmem_to_hbm [thread:$0]  %s1144, 128, %s1141, %s1128
        $region36: #{tpu_custom_call.1} parent=31 // pred_fallthru
          _
      $region32: #{tpu_custom_call.1} parent=5 // pred_fallthru
        _
      %p1147 = scmp.le.s32.totalorder 2, %s12
      // Predicated region
      $region37: #{tpu_custom_call.1} parent=5 // pred_check
        %p1148 = pneg %p1147
      $region38: #{tpu_custom_call.1} parent=5 // pred_check_branch
        %1150 = sbr.rel (%p1148) target = $region40
      $region39: #{tpu_custom_call.1} parent=5 // pred_region
        %s1151 = ssub.s32 %s12, 2
        // Predicated region
        $region41: #{tpu_custom_call.1} parent=39 // pred_check
          %p1152 = pneg %p123
        $region42: #{tpu_custom_call.1} parent=39 // pred_check_branch
          %1154 = sbr.rel (%p1152) target = $region44
        $region43: #{tpu_custom_call.1} parent=39 // pred_region
          %s1155 = sand.u32 %s108, 1
          %s1156 = scalar_lea.sflag [#allocation3], %s1155
          %s1157 = sand.u32 %s108, 1
          %s1158 = smul.addr %s1157, 8
          %s1159 = scalar_lea.vmem [#allocation2], %s1158
          %1160 = dma.done %s1156, 128
        $region44: #{tpu_custom_call.1} parent=39 // pred_fallthru
          _
      $region40: #{tpu_custom_call.1} parent=5 // pred_fallthru
        _
    $region6: #{tpu_custom_call.1} parent=1 // loop_footer
      %s16 = sadd.s32 1, %s12
    $region7: #{tpu_custom_call.1} parent=1 // loop_footer_branch
      %11 = sbr.rel target = $region3
    $region8: #{tpu_custom_call.1} parent=1 // loop_exit
      _
    %1161 = vsyncpa [#allocation3], 1
    %s1162 = scalar_lea.sflag [#allocation3], 1
    %1163 = vsyncpa %s1162, 1

</llo_original>
